<compile_context>
chip_gen: v5e
topology: v5e:2x2
jax: 0.10.0
libtpu: 0.0.40
codegen_flags: <defaults>
</compile_context>

<pallas_src>
import jax
import jax.numpy as jnp
from jax.experimental import pallas as pl
from jax.experimental.pallas import tpu as pltpu


def _self_attention_kernel(x_ref, xs_ref,
                           wt_ref, bt_ref,
                           wp_ref, bp_ref,
                           wg_ref, bg_ref,
                           wa_ref, ba_ref,
                           sigma_ref,
                           o_ref):
    # x_ref:  (1, C, TQ)  f32   current (batch, query-tile) block
    # xs_ref: (1, C, HW)  bf16  four 2x2-shift sub-grids concatenated on lanes
    x = x_ref[0]                                    # (C, TQ) f32 (exact residual)
    x_bf = x.astype(jnp.bfloat16)
    xs = xs_ref[0]                                  # (C, HW) bf16

    # theta = conv_theta(x_tile) -> (C/8, TQ)
    theta = (jnp.dot(wt_ref[...], x_bf, preferred_element_type=jnp.float32)
             + bt_ref[...])

    # conv + 2x2 max-pool == one full-lane-width matmul over the concatenated
    # shifts, then max over the 4 contiguous lane chunks, bias added once.
    hw4 = xs.shape[-1] // 4

    def proj_pool(w, bvec):
        y = jnp.dot(w, xs, preferred_element_type=jnp.float32)      # (Co, HW)
        pooled = jnp.maximum(
            jnp.maximum(y[:, 0 * hw4:1 * hw4], y[:, 1 * hw4:2 * hw4]),
            jnp.maximum(y[:, 2 * hw4:3 * hw4], y[:, 3 * hw4:4 * hw4]))
        return pooled + bvec

    phi = proj_pool(wp_ref[...], bp_ref[...])        # (C/8, HW/4) f32
    g = proj_pool(wg_ref[...], bg_ref[...])          # (C/2, HW/4) f32

    # logits^T = phi^T @ theta -> (HW/4, TQ): the big attention matrix is born
    # in keys-on-sublane layout, so it never needs a transpose. Only the tiny
    # f32 phi operand is relayout'd. K = C/8 is tiny, so f32 here is free.
    logits_t = jax.lax.dot_general(phi, theta, (((0,), (0,)), ((), ())),
                                   preferred_element_type=jnp.float32)

    # softmax over the pooled-key axis (sublane axis), f32, max-stabilised.
    m = jnp.max(logits_t, axis=0, keepdims=True)
    e = jnp.exp(logits_t - m)
    denom = jnp.sum(e, axis=0, keepdims=True)
    attn_t = e * pl.reciprocal(denom, approx=True)   # (HW/4, TQ)

    # attn_g = g @ attn^T -> (C/2, TQ)  (MXU-native orientation, no transposes)
    attn_g = jnp.dot(g.astype(jnp.bfloat16), attn_t.astype(jnp.bfloat16),
                     preferred_element_type=jnp.float32)

    # conv_attn(attn_g) -> (C, TQ)
    out_attn = (jnp.dot(wa_ref[...], attn_g.astype(jnp.bfloat16),
                        preferred_element_type=jnp.float32) + ba_ref[...])

    o_ref[0] = x + sigma_ref[0] * out_attn


def self_attention(x, params, tq=256):
    """x: (B, C, H, W) float32. params: dict of weights (see init_params)."""
    b, c, h, w = x.shape
    assert c % 8 == 0 and h % 2 == 0 and w % 2 == 0
    hw, hw4 = h * w, (h * w) // 4
    c8, c2 = c // 8, c // 2

    tq = min(tq, hw)
    assert hw % tq == 0, "query tile must divide H*W"
    nq = hw // tq

    x_flat = x.reshape(b, c, hw)                     # f32 (exact residual path)
    # Four 2x2-shift sub-grids concatenated along the lane axis (bf16):
    # one lane-dense matmul + chunk-max in the kernel == 1x1 conv + 2x2 maxpool.
    # TODO(synk): x is shipped twice (f32 x_flat + bf16 xs_cat); a single
    # shift-packed layout would cut input DMA further on DMA-bound configs.
    xs_cat = jnp.concatenate(
        [x[:, :, 0::2, 0::2].reshape(b, c, hw4),
         x[:, :, 0::2, 1::2].reshape(b, c, hw4),
         x[:, :, 1::2, 0::2].reshape(b, c, hw4),
         x[:, :, 1::2, 1::2].reshape(b, c, hw4)], axis=-1
    ).astype(jnp.bfloat16)

    bf = jnp.bfloat16
    wt, wp = params["w_theta"].astype(bf), params["w_phi"].astype(bf)
    wg, wa = params["w_g"].astype(bf), params["w_attn"].astype(bf)

    full = lambda shape: pl.BlockSpec(shape, lambda i, j: (0,) * len(shape))

    out_flat = pl.pallas_call(
        _self_attention_kernel,
        out_shape=jax.ShapeDtypeStruct((b, c, hw), jnp.float32),
        grid=(b, nq),
        in_specs=[
            pl.BlockSpec((1, c, tq), lambda i, j: (i, 0, j)),   # x query tile
            pl.BlockSpec((1, c, hw), lambda i, j: (i, 0, 0)),   # shifts (per-b)
            full((c8, c)), full((c8, 1)),
            full((c8, c)), full((c8, 1)),
            full((c2, c)), full((c2, 1)),
            full((c, c2)), full((c, 1)),
            pl.BlockSpec(memory_space=pltpu.MemorySpace.SMEM),  # sigma scalar
        ],
        out_specs=pl.BlockSpec((1, c, tq), lambda i, j: (i, 0, j)),
        compiler_params=pltpu.CompilerParams(
            dimension_semantics=("parallel", "parallel"),
            vmem_limit_bytes=64 * 1024 * 1024),
    )(x_flat, xs_cat,
      wt, params["b_theta"],
      wp, params["b_phi"],
      wg, params["b_g"],
      wa, params["b_attn"],
      params["sigma"])

    return out_flat.reshape(b, c, h, w)


def init_params(key, c, sigma_value=0.0):
    """Deterministic synthetic parameters matching SelfAttention.__init__."""
    c8, c2 = c // 8, c // 2
    ks = jax.random.split(key, 8)
    scale = 0.1
    return {
        "w_theta": scale * jax.random.normal(ks[0], (c8, c), jnp.float32),
        "b_theta": scale * jax.random.normal(ks[1], (c8, 1), jnp.float32),
        "w_phi":   scale * jax.random.normal(ks[2], (c8, c), jnp.float32),
        "b_phi":   scale * jax.random.normal(ks[3], (c8, 1), jnp.float32),
        "w_g":     scale * jax.random.normal(ks[4], (c2, c), jnp.float32),
        "b_g":     scale * jax.random.normal(ks[5], (c2, 1), jnp.float32),
        "w_attn":  scale * jax.random.normal(ks[6], (c, c2), jnp.float32),
        "b_attn":  scale * jax.random.normal(ks[7], (c, 1), jnp.float32),
        # nn.Parameter(torch.zeros(1)) -> 0 by default; configurable for tests.
        "sigma":   jnp.full((1,), sigma_value, jnp.float32),
    }


def reference(x, p):
    """Pure-JAX f32 reference mirroring the PyTorch forward exactly."""
    b, c, h, w = x.shape
    hw = h * w
    xf = x.reshape(b, c, hw)

    def pool2x2(t):  # t: (B, C', H, W)
        return jax.lax.reduce_window(t, -jnp.inf, jax.lax.max,
                                     (1, 1, 2, 2), (1, 1, 2, 2), "VALID")

    theta = jnp.einsum("oc,bcp->bop", p["w_theta"], xf) + p["b_theta"][None]
    phi = jnp.einsum("oc,bcp->bop", p["w_phi"], xf) + p["b_phi"][None]
    phi = pool2x2(phi.reshape(b, c // 8, h, w)).reshape(b, c // 8, hw // 4)
    attn = jax.nn.softmax(jnp.einsum("bcq,bck->bqk", theta, phi), axis=-1)
    g = jnp.einsum("oc,bcp->bop", p["w_g"], xf) + p["b_g"][None]
    g = pool2x2(g.reshape(b, c // 2, h, w)).reshape(b, c // 2, hw // 4)
    attn_g = jnp.einsum("bck,bqk->bcq", g, attn)
    out_attn = jnp.einsum("oc,bcq->boq", p["w_attn"], attn_g) + p["b_attn"][None]
    return (xf + p["sigma"][0] * out_attn).reshape(b, c, h, w)


if __name__ == "__main__":
    B, C, H, W = 2, 16, 16, 16   # in_channels must be divisible by 8
    TQ = 128                     # exercises the query-tile grid axis (2 tiles)
    key = jax.random.PRNGKey(0)
    kx, kp = jax.random.split(key)
    x = jax.random.normal(kx, (B, C, H, W), jnp.float32)

    # Faithful-to-__init__ run (sigma = 0): residual path must be exact.
    params0 = init_params(kp, C, sigma_value=0.0)
    out0 = jax.block_until_ready(self_attention(x, params0, tq=TQ))

    # Non-trivial sigma: the full attention path checked against the f32
    # reference (bf16 MXU feeds -> loosened tolerance).
    params1 = init_params(kp, C, sigma_value=0.75)
    out1 = jax.block_until_ready(self_attention(x, params1, tq=TQ))
    ref1 = reference(x, params1)

    assert out0.shape == (B, C, H, W)
    assert jnp.allclose(out0, x, atol=1e-5)
    err = float(jnp.max(jnp.abs(out1 - ref1)))
    assert jnp.allclose(out1, ref1, atol=2e-2, rtol=2e-2), err
    print("KERNEL_OK")
</pallas_src>

<mosaic_0001>
module attributes {stable_mosaic.version = 11 : i64} {
  func.func @_self_attention_kernel(%arg0: i32, %arg1: i32, %arg2: memref<1x16x128xf32, #tpu.memory_space<vmem>>, %arg3: memref<1x16x256xbf16, #tpu.memory_space<vmem>>, %arg4: memref<2x16xbf16, #tpu.memory_space<vmem>>, %arg5: memref<2x1xf32, #tpu.memory_space<vmem>>, %arg6: memref<2x16xbf16, #tpu.memory_space<vmem>>, %arg7: memref<2x1xf32, #tpu.memory_space<vmem>>, %arg8: memref<8x16xbf16, #tpu.memory_space<vmem>>, %arg9: memref<8x1xf32, #tpu.memory_space<vmem>>, %arg10: memref<16x8xbf16, #tpu.memory_space<vmem>>, %arg11: memref<16x1xf32, #tpu.memory_space<vmem>>, %arg12: memref<1xf32, #tpu.memory_space<smem>>, %arg13: memref<1x16x128xf32, #tpu.memory_space<vmem>>) attributes {dimension_semantics = [#tpu.dimension_semantics<parallel>, #tpu.dimension_semantics<parallel>], iteration_bounds = array<i64: 2, 2>, scalar_prefetch = 0 : i64, scratch_operands = 0 : i64, tpu.core_type = #tpu.core_type<tc>, window_params = [{transform_indices = @transform_0, window_bounds = array<i64: 1, 16, 128>}, {transform_indices = @transform_1, window_bounds = array<i64: 1, 16, 256>}, {pipeline_mode = #tpu.pipeline_mode<synchronous>, transform_indices = @transform_2, window_bounds = array<i64: 2, 16>}, {pipeline_mode = #tpu.pipeline_mode<synchronous>, transform_indices = @transform_3, window_bounds = array<i64: 2, 1>}, {pipeline_mode = #tpu.pipeline_mode<synchronous>, transform_indices = @transform_4, window_bounds = array<i64: 2, 16>}, {pipeline_mode = #tpu.pipeline_mode<synchronous>, transform_indices = @transform_5, window_bounds = array<i64: 2, 1>}, {pipeline_mode = #tpu.pipeline_mode<synchronous>, transform_indices = @transform_6, window_bounds = array<i64: 8, 16>}, {pipeline_mode = #tpu.pipeline_mode<synchronous>, transform_indices = @transform_7, window_bounds = array<i64: 8, 1>}, {pipeline_mode = #tpu.pipeline_mode<synchronous>, transform_indices = @transform_8, window_bounds = array<i64: 16, 8>}, {pipeline_mode = #tpu.pipeline_mode<synchronous>, transform_indices = @transform_9, window_bounds = array<i64: 16, 1>}, {transform_indices = @transform_10, window_bounds = array<i64: 1>}, {transform_indices = @transform_11, window_bounds = array<i64: 1, 16, 128>}]} {
    %c0 = arith.constant 0 : index
    %c0_0 = arith.constant 0 : index
    %c0_1 = arith.constant 0 : index
    %0 = vector.load %arg2[%c0, %c0_0, %c0_1] : memref<1x16x128xf32, #tpu.memory_space<vmem>>, vector<1x16x128xf32>
    %1 = vector.shape_cast %0 : vector<1x16x128xf32> to vector<16x128xf32>
    %2 = arith.truncf %1 : vector<16x128xf32> to vector<16x128xbf16>
    %c0_2 = arith.constant 0 : index
    %c0_3 = arith.constant 0 : index
    %c0_4 = arith.constant 0 : index
    %3 = vector.load %arg3[%c0_2, %c0_3, %c0_4] : memref<1x16x256xbf16, #tpu.memory_space<vmem>>, vector<1x16x256xbf16>
    %4 = vector.shape_cast %3 : vector<1x16x256xbf16> to vector<16x256xbf16>
    %c0_5 = arith.constant 0 : index
    %c0_6 = arith.constant 0 : index
    %5 = vector.load %arg4[%c0_5, %c0_6] : memref<2x16xbf16, #tpu.memory_space<vmem>>, vector<2x16xbf16>
    %cst = arith.constant dense<0.000000e+00> : vector<2x128xf32>
    %6 = tpu.matmul %5, %2, %cst {dimension_numbers = #tpu.dot_dimension_numbers<[1], [0], [0], [1], [0, 0, 1, 1], [], []>} : vector<2x16xbf16>, vector<16x128xbf16>, vector<2x128xf32> -> vector<2x128xf32>
    %c0_7 = arith.constant 0 : index
    %c0_8 = arith.constant 0 : index
    %7 = vector.load %arg5[%c0_7, %c0_8] : memref<2x1xf32, #tpu.memory_space<vmem>>, vector<2x1xf32>
    %8 = vector.broadcast %7 : vector<2x1xf32> to vector<2x128xf32>
    %9 = arith.addf %6, %8 : vector<2x128xf32>
    %c0_9 = arith.constant 0 : index
    %c0_10 = arith.constant 0 : index
    %10 = vector.load %arg6[%c0_9, %c0_10] : memref<2x16xbf16, #tpu.memory_space<vmem>>, vector<2x16xbf16>
    %c0_11 = arith.constant 0 : index
    %c0_12 = arith.constant 0 : index
    %11 = vector.load %arg7[%c0_11, %c0_12] : memref<2x1xf32, #tpu.memory_space<vmem>>, vector<2x1xf32>
    %cst_13 = arith.constant dense<0.000000e+00> : vector<2x256xf32>
    %12 = tpu.matmul %10, %4, %cst_13 {dimension_numbers = #tpu.dot_dimension_numbers<[1], [0], [0], [1], [0, 0, 1, 1], [], []>} : vector<2x16xbf16>, vector<16x256xbf16>, vector<2x256xf32> -> vector<2x256xf32>
    %13 = vector.extract_strided_slice %12 {offsets = [0, 0], sizes = [2, 64], strides = [1, 1]} : vector<2x256xf32> to vector<2x64xf32>
    %14 = vector.extract_strided_slice %12 {offsets = [0, 64], sizes = [2, 64], strides = [1, 1]} : vector<2x256xf32> to vector<2x64xf32>
    %15 = arith.maximumf %13, %14 : vector<2x64xf32>
    %16 = vector.extract_strided_slice %12 {offsets = [0, 128], sizes = [2, 64], strides = [1, 1]} : vector<2x256xf32> to vector<2x64xf32>
    %17 = vector.extract_strided_slice %12 {offsets = [0, 192], sizes = [2, 64], strides = [1, 1]} : vector<2x256xf32> to vector<2x64xf32>
    %18 = arith.maximumf %16, %17 : vector<2x64xf32>
    %19 = arith.maximumf %15, %18 : vector<2x64xf32>
    %20 = vector.broadcast %11 : vector<2x1xf32> to vector<2x64xf32>
    %21 = arith.addf %19, %20 : vector<2x64xf32>
    %c0_14 = arith.constant 0 : index
    %c0_15 = arith.constant 0 : index
    %22 = vector.load %arg8[%c0_14, %c0_15] : memref<8x16xbf16, #tpu.memory_space<vmem>>, vector<8x16xbf16>
    %c0_16 = arith.constant 0 : index
    %c0_17 = arith.constant 0 : index
    %23 = vector.load %arg9[%c0_16, %c0_17] : memref<8x1xf32, #tpu.memory_space<vmem>>, vector<8x1xf32>
    %cst_18 = arith.constant dense<0.000000e+00> : vector<8x256xf32>
    %24 = tpu.matmul %22, %4, %cst_18 {dimension_numbers = #tpu.dot_dimension_numbers<[1], [0], [0], [1], [0, 0, 1, 1], [], []>} : vector<8x16xbf16>, vector<16x256xbf16>, vector<8x256xf32> -> vector<8x256xf32>
    %25 = vector.extract_strided_slice %24 {offsets = [0, 0], sizes = [8, 64], strides = [1, 1]} : vector<8x256xf32> to vector<8x64xf32>
    %26 = vector.extract_strided_slice %24 {offsets = [0, 64], sizes = [8, 64], strides = [1, 1]} : vector<8x256xf32> to vector<8x64xf32>
    %27 = arith.maximumf %25, %26 : vector<8x64xf32>
    %28 = vector.extract_strided_slice %24 {offsets = [0, 128], sizes = [8, 64], strides = [1, 1]} : vector<8x256xf32> to vector<8x64xf32>
    %29 = vector.extract_strided_slice %24 {offsets = [0, 192], sizes = [8, 64], strides = [1, 1]} : vector<8x256xf32> to vector<8x64xf32>
    %30 = arith.maximumf %28, %29 : vector<8x64xf32>
    %31 = arith.maximumf %27, %30 : vector<8x64xf32>
    %32 = vector.broadcast %23 : vector<8x1xf32> to vector<8x64xf32>
    %33 = arith.addf %31, %32 : vector<8x64xf32>
    %cst_19 = arith.constant dense<0.000000e+00> : vector<64x128xf32>
    %34 = tpu.matmul %21, %9, %cst_19 {dimension_numbers = #tpu.dot_dimension_numbers<[0], [0], [1], [1], [0, 1, 1, 1], [], []>} : vector<2x64xf32>, vector<2x128xf32>, vector<64x128xf32> -> vector<64x128xf32>
    %cst_20 = arith.constant dense<0xFF800000> : vector<128xf32>
    %35 = vector.multi_reduction <maximumf>, %34, %cst_20 [0] : vector<64x128xf32> to vector<128xf32>
    %36 = vector.shape_cast %35 : vector<128xf32> to vector<1x128xf32>
    %37 = vector.broadcast %36 : vector<1x128xf32> to vector<64x128xf32>
    %38 = arith.subf %34, %37 : vector<64x128xf32>
    %39 = math.exp %38 : vector<64x128xf32>
    %cst_21 = arith.constant dense<0.000000e+00> : vector<128xf32>
    %40 = vector.multi_reduction <add>, %39, %cst_21 [0] : vector<64x128xf32> to vector<128xf32>
    %41 = vector.shape_cast %40 : vector<128xf32> to vector<1x128xf32>
    %42 = tpu.reciprocal %41 {approx = true} : vector<1x128xf32> -> vector<1x128xf32>
    %43 = vector.broadcast %42 : vector<1x128xf32> to vector<64x128xf32>
    %44 = arith.mulf %39, %43 : vector<64x128xf32>
    %45 = arith.truncf %33 : vector<8x64xf32> to vector<8x64xbf16>
    %46 = arith.truncf %44 : vector<64x128xf32> to vector<64x128xbf16>
    %cst_22 = arith.constant dense<0.000000e+00> : vector<8x128xf32>
    %47 = tpu.matmul %45, %46, %cst_22 {dimension_numbers = #tpu.dot_dimension_numbers<[1], [0], [0], [1], [0, 0, 1, 1], [], []>} : vector<8x64xbf16>, vector<64x128xbf16>, vector<8x128xf32> -> vector<8x128xf32>
    %c0_23 = arith.constant 0 : index
    %c0_24 = arith.constant 0 : index
    %48 = vector.load %arg10[%c0_23, %c0_24] : memref<16x8xbf16, #tpu.memory_space<vmem>>, vector<16x8xbf16>
    %49 = arith.truncf %47 : vector<8x128xf32> to vector<8x128xbf16>
    %cst_25 = arith.constant dense<0.000000e+00> : vector<16x128xf32>
    %50 = tpu.matmul %48, %49, %cst_25 {dimension_numbers = #tpu.dot_dimension_numbers<[1], [0], [0], [1], [0, 0, 1, 1], [], []>} : vector<16x8xbf16>, vector<8x128xbf16>, vector<16x128xf32> -> vector<16x128xf32>
    %c0_26 = arith.constant 0 : index
    %c0_27 = arith.constant 0 : index
    %51 = vector.load %arg11[%c0_26, %c0_27] : memref<16x1xf32, #tpu.memory_space<vmem>>, vector<16x1xf32>
    %52 = vector.broadcast %51 : vector<16x1xf32> to vector<16x128xf32>
    %53 = arith.addf %50, %52 : vector<16x128xf32>
    %c0_28 = arith.constant 0 : index
    %54 = memref.load %arg12[%c0_28] : memref<1xf32, #tpu.memory_space<smem>>
    %55 = vector.broadcast %54 : f32 to vector<16x128xf32>
    %56 = arith.mulf %55, %53 : vector<16x128xf32>
    %57 = arith.addf %1, %56 : vector<16x128xf32>
    %c0_29 = arith.constant 0 : index
    %c0_30 = arith.constant 0 : index
    %c0_31 = arith.constant 0 : index
    %58 = vector.load %arg13[%c0_29, %c0_30, %c0_31] : memref<1x16x128xf32, #tpu.memory_space<vmem>>, vector<1x16x128xf32>
    %59 = vector.shape_cast %58 : vector<1x16x128xf32> to vector<16x128xf32>
    %60 = vector.shape_cast %57 : vector<16x128xf32> to vector<1x16x128xf32>
    tpu.vector_store %arg13[%c0_29, %c0_30, %c0_31], %60 {strides = array<i32>} : memref<1x16x128xf32, #tpu.memory_space<vmem>>, vector<1x16x128xf32>,
    return
  }
  func.func @transform_0(%arg0: i32, %arg1: i32) -> (i32, i32, i32) {
    %c0_i32 = arith.constant 0 : i32
    %c0_i32_0 = arith.constant 0 : i32
    return %arg0, %c0_i32, %arg1 : i32, i32, i32
  }
  func.func @transform_1(%arg0: i32, %arg1: i32) -> (i32, i32, i32) {
    %c0_i32 = arith.constant 0 : i32
    %c0_i32_0 = arith.constant 0 : i32
    %c0_i32_1 = arith.constant 0 : i32
    return %arg0, %c0_i32, %c0_i32_0 : i32, i32, i32
  }
  func.func @transform_2(%arg0: i32, %arg1: i32) -> (i32, i32) {
    %c0_i32 = arith.constant 0 : i32
    %c0_i32_0 = arith.constant 0 : i32
    %c0_i32_1 = arith.constant 0 : i32
    return %c0_i32, %c0_i32_0 : i32, i32
  }
  func.func @transform_3(%arg0: i32, %arg1: i32) -> (i32, i32) {
    %c0_i32 = arith.constant 0 : i32
    %c0_i32_0 = arith.constant 0 : i32
    %c0_i32_1 = arith.constant 0 : i32
    return %c0_i32, %c0_i32_0 : i32, i32
  }
  func.func @transform_4(%arg0: i32, %arg1: i32) -> (i32, i32) {
    %c0_i32 = arith.constant 0 : i32
    %c0_i32_0 = arith.constant 0 : i32
    %c0_i32_1 = arith.constant 0 : i32
    return %c0_i32, %c0_i32_0 : i32, i32
  }
  func.func @transform_5(%arg0: i32, %arg1: i32) -> (i32, i32) {
    %c0_i32 = arith.constant 0 : i32
    %c0_i32_0 = arith.constant 0 : i32
    %c0_i32_1 = arith.constant 0 : i32
    return %c0_i32, %c0_i32_0 : i32, i32
  }
  func.func @transform_6(%arg0: i32, %arg1: i32) -> (i32, i32) {
    %c0_i32 = arith.constant 0 : i32
    %c0_i32_0 = arith.constant 0 : i32
    %c0_i32_1 = arith.constant 0 : i32
    return %c0_i32, %c0_i32_0 : i32, i32
  }
  func.func @transform_7(%arg0: i32, %arg1: i32) -> (i32, i32) {
    %c0_i32 = arith.constant 0 : i32
    %c0_i32_0 = arith.constant 0 : i32
    %c0_i32_1 = arith.constant 0 : i32
    return %c0_i32, %c0_i32_0 : i32, i32
  }
  func.func @transform_8(%arg0: i32, %arg1: i32) -> (i32, i32) {
    %c0_i32 = arith.constant 0 : i32
    %c0_i32_0 = arith.constant 0 : i32
    %c0_i32_1 = arith.constant 0 : i32
    return %c0_i32, %c0_i32_0 : i32, i32
  }
  func.func @transform_9(%arg0: i32, %arg1: i32) -> (i32, i32) {
    %c0_i32 = arith.constant 0 : i32
    %c0_i32_0 = arith.constant 0 : i32
    %c0_i32_1 = arith.constant 0 : i32
    return %c0_i32, %c0_i32_0 : i32, i32
  }
  func.func @transform_10(%arg0: i32, %arg1: i32) -> i32 {
    %c0_i32 = arith.constant 0 : i32
    %c0_i32_0 = arith.constant 0 : i32
    return %c0_i32 : i32
  }
  func.func @transform_11(%arg0: i32, %arg1: i32) -> (i32, i32, i32) {
    %c0_i32 = arith.constant 0 : i32
    %c0_i32_0 = arith.constant 0 : i32
    return %arg0, %c0_i32, %arg1 : i32, i32, i32
  }
}

</mosaic_0001>

<llo_original>
// kernel: tpu_custom_call.1
$region0: #{tpu_custom_call.1}
  #allocation0 [shape = 'u32[]', space=smem, size = 0x4, offset = 0x4, fixed_abs, tag = 'smem constant byte address 0x4 - core index']
  #allocation1 [shape = 'u32[72,128]{1,0:T(1,128)}', space=vmem, size = 0x9000, scoped, tag = 'internal scratch']
  #allocation2 [shape = 'f32[1]{0:T(128)S(6)}', space=smem, size = 0x200, scoped, tag = 'scoped memory for tpu_custom_call.1']
  %s0 = inlined_call_operand.hbm [shape: f32[2,16,256], index: 0, kind: input, shape index: {}]
  %s1 = inlined_call_operand.hbm [shape: bf16[2,16,256], index: 1, kind: input, shape index: {}]
  %s2 = inlined_call_operand.vmem [shape: bf16[2,16], index: 2, kind: input, shape index: {}]
  %s3 = inlined_call_operand.vmem [shape: f32[2,1], index: 3, kind: input, shape index: {}]
  %s4 = inlined_call_operand.vmem [shape: bf16[2,16], index: 4, kind: input, shape index: {}]
  %s5 = inlined_call_operand.vmem [shape: f32[2,1], index: 5, kind: input, shape index: {}]
  %s6 = inlined_call_operand.vmem [shape: bf16[8,16], index: 6, kind: input, shape index: {}]
  %s7 = inlined_call_operand.vmem [shape: f32[8,1], index: 7, kind: input, shape index: {}]
  %s8 = inlined_call_operand.vmem [shape: bf16[16,8], index: 8, kind: input, shape index: {}]
  %s9 = inlined_call_operand.vmem [shape: f32[16,1], index: 9, kind: input, shape index: {}]
  %s10 = inlined_call_operand.<no memory space> [shape: f32[1], index: 10, kind: input, shape index: {}]
  %s11 = inlined_call_operand.hbm [shape: f32[2,16,256], index: 11, kind: output, shape index: {}]
  %s12 = sld [smem:[#allocation0]]
  $region85: #{tpu_custom_call.1} parent=0
    _
  %s14 = ssub.s32 1, %s12
  %s15 = scalar_select 0, %s14, %s12
  %16 = sst [smem:[#allocation2]] %s10
  $region1: #{tpu_custom_call.1} parent=0
    #allocation3 [shape = 'u8[16384]{0}', space=vmem, size = 0x4000, scoped, tag = 'input window, operand 0']
    #allocation4 [shape = 's32[2]{0}', space=sflag, size = 0x8, scoped, tag = 'scoped memory for tpu_custom_call.1']
    #allocation5 [shape = 's32[2]{0}', space=sflag, size = 0x8, scoped, tag = 'scoped memory for tpu_custom_call.1']
    #allocation6 [shape = 'u8[16384]{0}', space=vmem, size = 0x4000, scoped, tag = 'input window, operand 1']
    #allocation7 [shape = 's32[2]{0}', space=sflag, size = 0x8, scoped, tag = 'scoped memory for tpu_custom_call.1']
    #allocation8 [shape = 'u8[16384]{0}', space=vmem, size = 0x4000, scoped, tag = 'output window, operand 0']
    %17 = vsyncpa [#allocation4], 0
    %s18 = scalar_lea.sflag [#allocation4], 1
    %19 = vsyncpa %s18, 0
    %20 = vsyncpa [#allocation7], 0
    %s21 = scalar_lea.sflag [#allocation7], 1
    %22 = vsyncpa %s21, 0
    %23 = vsyncpa [#allocation5], 0
    %s24 = scalar_lea.sflag [#allocation5], 1
    %25 = vsyncpa %s24, 0
    loop: start=0, step=1, limit=6
    $region2: #{tpu_custom_call.1} parent=1 // loop_pre_header
      _
    $region3: #{tpu_custom_call.1} parent=1 // loop_header
      %s27 = sphi 0, %s31
      %p28 = scmp.ge.s32.totalorder %s27, 6
      %s34 = sphi 0, %s46
      %s35 = sphi 0, %s42
      %s36 = sphi 0, %s34
      %s37 = sphi 0, %s35
      %s38 = sphi 0, %s36
      %s39 = sphi 0, %s37
      %s51 = sphi 0, %s53
      %s54 = sphi 0, %s51
      %s55 = sphi 0, %s54
      %s71 = sphi 0, %s55
      %s77 = sphi 0, %s79
      %s80 = sphi 0, %s77
      %s81 = sphi 0, %s80
      %s97 = sphi 0, %s81
      %s101 = sphi 0, %s101
      %s103 = sphi 0, %s101
      %s104 = sphi 0, %s103
      %s118 = sphi 0, %s104
      %s122 = sphi 0, %s122
      %s124 = sphi 0, %s122
      %s125 = sphi 0, %s124
      %s139 = sphi 0, %s125
      %s143 = sphi 0, %s143
      %s145 = sphi 0, %s143
      %s146 = sphi 0, %s145
      %s160 = sphi 0, %s146
      %s164 = sphi 0, %s164
      %s166 = sphi 0, %s164
      %s167 = sphi 0, %s166
      %s181 = sphi 0, %s167
      %s185 = sphi 0, %s185
      %s187 = sphi 0, %s185
      %s188 = sphi 0, %s187
      %s202 = sphi 0, %s188
      %s206 = sphi 0, %s206
      %s208 = sphi 0, %s206
      %s209 = sphi 0, %s208
      %s223 = sphi 0, %s209
      %s227 = sphi 0, %s227
      %s229 = sphi 0, %s227
      %s230 = sphi 0, %s229
      %s244 = sphi 0, %s230
      %s248 = sphi 0, %s248
      %s250 = sphi 0, %s248
      %s251 = sphi 0, %s250
      %s265 = sphi 0, %s251
      %s269 = sphi 0, %s269
      %s271 = sphi 0, %s269
      %s272 = sphi 0, %s271
      %s286 = sphi 0, %s272
      %s294 = sphi 0, %s296
      %s297 = sphi 0, %s294
      %s298 = sphi 0, %s297
      %s314 = sphi 0, %s298
    $region4: #{tpu_custom_call.1} parent=1 // loop_header_branch
      %30 = sbr.rel (%p28) target = $region8
    $region5: #{tpu_custom_call.1} parent=1 // loop_body
      %s32 = ssub.s32 %s27, 1
      %s33 = ssub.s32 %s27, 2
      %s40 = sadd.s32 1, %s35
      %p41 = scmp.ge.s32.totalorder %s40, 2
      %s42 = scalar_select %p41, 0, %s40
      %s43 = sadd.s32 1, %s34
      %s44 = scalar_select %p41, %s43, %s34
      %p45 = scmp.ge.s32.totalorder %s44, 2
      %s46 = scalar_select %p45, 0, %s44
      %s47 = ssub.s32 %s34, %s46
      %s48 = ssub.s32 %s35, %s42
      %s49 = sor.u32 %s47, %s48
      %p50 = scmp.eq.s32.totalorder %s49, 0
      %s52 = sadd.s32 %s51, 1
      %s53 = scalar_select %p50, %s51, %s52
      %p56 = pneg %p50
      %p57 = scmp.eq.s32.totalorder %s27, 3
      %p58 = por %p56, %p57
      %p59 = scmp.ne.s32.totalorder %s51, %s54
      %p60 = scmp.eq.s32.totalorder %s27, 0
      %p61 = por %p59, %p60
      %p62 = scmp.ne.s32.totalorder %s51, %s54
      %p63 = scmp.eq.s32.totalorder %s32, 3
      %p64 = por %p62, %p63
      %p65 = scmp.ne.s32.totalorder %s54, %s55
      %p66 = scmp.eq.s32.totalorder %s32, 0
      %p67 = por %p65, %p66
      %p68 = scmp.ne.s32.totalorder %s54, %s55
      %p69 = scmp.eq.s32.totalorder %s33, 3
      %p70 = por %p68, %p69
      %p72 = scmp.ne.s32.totalorder %s55, %s71
      %p73 = scmp.eq.s32.totalorder %s33, 0
      %p74 = por %p72, %p73
      %s75 = ssub.s32 %s34, %s46
      %p76 = scmp.eq.s32.totalorder %s75, 0
      %s78 = sadd.s32 %s77, 1
      %s79 = scalar_select %p76, %s77, %s78
      %p82 = pneg %p76
      %p83 = scmp.eq.s32.totalorder %s27, 3
      %p84 = por %p82, %p83
      %p85 = scmp.ne.s32.totalorder %s77, %s80
      %p86 = scmp.eq.s32.totalorder %s27, 0
      %p87 = por %p85, %p86
      %p88 = scmp.ne.s32.totalorder %s77, %s80
      %p89 = scmp.eq.s32.totalorder %s32, 3
      %p90 = por %p88, %p89
      %p91 = scmp.ne.s32.totalorder %s80, %s81
      %p92 = scmp.eq.s32.totalorder %s32, 0
      %p93 = por %p91, %p92
      %p94 = scmp.ne.s32.totalorder %s80, %s81
      %p95 = scmp.eq.s32.totalorder %s33, 3
      %p96 = por %p94, %p95
      %p98 = scmp.ne.s32.totalorder %s81, %s97
      %p99 = scmp.eq.s32.totalorder %s33, 0
      %p100 = por %p98, %p99
      %s102 = sadd.s32 %s101, 1
      %p105 = scmp.eq.s32.totalorder %s27, 3
      %p106 = scmp.ne.s32.totalorder %s101, %s103
      %p107 = scmp.eq.s32.totalorder %s27, 0
      %p108 = por %p106, %p107
      %p109 = scmp.ne.s32.totalorder %s101, %s103
      %p110 = scmp.eq.s32.totalorder %s32, 3
      %p111 = por %p109, %p110
      %p112 = scmp.ne.s32.totalorder %s103, %s104
      %p113 = scmp.eq.s32.totalorder %s32, 0
      %p114 = por %p112, %p113
      %p115 = scmp.ne.s32.totalorder %s103, %s104
      %p116 = scmp.eq.s32.totalorder %s33, 3
      %p117 = por %p115, %p116
      %p119 = scmp.ne.s32.totalorder %s104, %s118
      %p120 = scmp.eq.s32.totalorder %s33, 0
      %p121 = por %p119, %p120
      %s123 = sadd.s32 %s122, 1
      %p126 = scmp.eq.s32.totalorder %s27, 3
      %p127 = scmp.ne.s32.totalorder %s122, %s124
      %p128 = scmp.eq.s32.totalorder %s27, 0
      %p129 = por %p127, %p128
      %p130 = scmp.ne.s32.totalorder %s122, %s124
      %p131 = scmp.eq.s32.totalorder %s32, 3
      %p132 = por %p130, %p131
      %p133 = scmp.ne.s32.totalorder %s124, %s125
      %p134 = scmp.eq.s32.totalorder %s32, 0
      %p135 = por %p133, %p134
      %p136 = scmp.ne.s32.totalorder %s124, %s125
      %p137 = scmp.eq.s32.totalorder %s33, 3
      %p138 = por %p136, %p137
      %p140 = scmp.ne.s32.totalorder %s125, %s139
      %p141 = scmp.eq.s32.totalorder %s33, 0
      %p142 = por %p140, %p141
      %s144 = sadd.s32 %s143, 1
      %p147 = scmp.eq.s32.totalorder %s27, 3
      %p148 = scmp.ne.s32.totalorder %s143, %s145
      %p149 = scmp.eq.s32.totalorder %s27, 0
      %p150 = por %p148, %p149
      %p151 = scmp.ne.s32.totalorder %s143, %s145
      %p152 = scmp.eq.s32.totalorder %s32, 3
      %p153 = por %p151, %p152
      %p154 = scmp.ne.s32.totalorder %s145, %s146
      %p155 = scmp.eq.s32.totalorder %s32, 0
      %p156 = por %p154, %p155
      %p157 = scmp.ne.s32.totalorder %s145, %s146
      %p158 = scmp.eq.s32.totalorder %s33, 3
      %p159 = por %p157, %p158
      %p161 = scmp.ne.s32.totalorder %s146, %s160
      %p162 = scmp.eq.s32.totalorder %s33, 0
      %p163 = por %p161, %p162
      %s165 = sadd.s32 %s164, 1
      %p168 = scmp.eq.s32.totalorder %s27, 3
      %p169 = scmp.ne.s32.totalorder %s164, %s166
      %p170 = scmp.eq.s32.totalorder %s27, 0
      %p171 = por %p169, %p170
      %p172 = scmp.ne.s32.totalorder %s164, %s166
      %p173 = scmp.eq.s32.totalorder %s32, 3
      %p174 = por %p172, %p173
      %p175 = scmp.ne.s32.totalorder %s166, %s167
      %p176 = scmp.eq.s32.totalorder %s32, 0
      %p177 = por %p175, %p176
      %p178 = scmp.ne.s32.totalorder %s166, %s167
      %p179 = scmp.eq.s32.totalorder %s33, 3
      %p180 = por %p178, %p179
      %p182 = scmp.ne.s32.totalorder %s167, %s181
      %p183 = scmp.eq.s32.totalorder %s33, 0
      %p184 = por %p182, %p183
      %s186 = sadd.s32 %s185, 1
      %p189 = scmp.eq.s32.totalorder %s27, 3
      %p190 = scmp.ne.s32.totalorder %s185, %s187
      %p191 = scmp.eq.s32.totalorder %s27, 0
      %p192 = por %p190, %p191
      %p193 = scmp.ne.s32.totalorder %s185, %s187
      %p194 = scmp.eq.s32.totalorder %s32, 3
      %p195 = por %p193, %p194
      %p196 = scmp.ne.s32.totalorder %s187, %s188
      %p197 = scmp.eq.s32.totalorder %s32, 0
      %p198 = por %p196, %p197
      %p199 = scmp.ne.s32.totalorder %s187, %s188
      %p200 = scmp.eq.s32.totalorder %s33, 3
      %p201 = por %p199, %p200
      %p203 = scmp.ne.s32.totalorder %s188, %s202
      %p204 = scmp.eq.s32.totalorder %s33, 0
      %p205 = por %p203, %p204
      %s207 = sadd.s32 %s206, 1
      %p210 = scmp.eq.s32.totalorder %s27, 3
      %p211 = scmp.ne.s32.totalorder %s206, %s208
      %p212 = scmp.eq.s32.totalorder %s27, 0
      %p213 = por %p211, %p212
      %p214 = scmp.ne.s32.totalorder %s206, %s208
      %p215 = scmp.eq.s32.totalorder %s32, 3
      %p216 = por %p214, %p215
      %p217 = scmp.ne.s32.totalorder %s208, %s209
      %p218 = scmp.eq.s32.totalorder %s32, 0
      %p219 = por %p217, %p218
      %p220 = scmp.ne.s32.totalorder %s208, %s209
      %p221 = scmp.eq.s32.totalorder %s33, 3
      %p222 = por %p220, %p221
      %p224 = scmp.ne.s32.totalorder %s209, %s223
      %p225 = scmp.eq.s32.totalorder %s33, 0
      %p226 = por %p224, %p225
      %s228 = sadd.s32 %s227, 1
      %p231 = scmp.eq.s32.totalorder %s27, 3
      %p232 = scmp.ne.s32.totalorder %s227, %s229
      %p233 = scmp.eq.s32.totalorder %s27, 0
      %p234 = por %p232, %p233
      %p235 = scmp.ne.s32.totalorder %s227, %s229
      %p236 = scmp.eq.s32.totalorder %s32, 3
      %p237 = por %p235, %p236
      %p238 = scmp.ne.s32.totalorder %s229, %s230
      %p239 = scmp.eq.s32.totalorder %s32, 0
      %p240 = por %p238, %p239
      %p241 = scmp.ne.s32.totalorder %s229, %s230
      %p242 = scmp.eq.s32.totalorder %s33, 3
      %p243 = por %p241, %p242
      %p245 = scmp.ne.s32.totalorder %s230, %s244
      %p246 = scmp.eq.s32.totalorder %s33, 0
      %p247 = por %p245, %p246
      %s249 = sadd.s32 %s248, 1
      %p252 = scmp.eq.s32.totalorder %s27, 3
      %p253 = scmp.ne.s32.totalorder %s248, %s250
      %p254 = scmp.eq.s32.totalorder %s27, 0
      %p255 = por %p253, %p254
      %p256 = scmp.ne.s32.totalorder %s248, %s250
      %p257 = scmp.eq.s32.totalorder %s32, 3
      %p258 = por %p256, %p257
      %p259 = scmp.ne.s32.totalorder %s250, %s251
      %p260 = scmp.eq.s32.totalorder %s32, 0
      %p261 = por %p259, %p260
      %p262 = scmp.ne.s32.totalorder %s250, %s251
      %p263 = scmp.eq.s32.totalorder %s33, 3
      %p264 = por %p262, %p263
      %p266 = scmp.ne.s32.totalorder %s251, %s265
      %p267 = scmp.eq.s32.totalorder %s33, 0
      %p268 = por %p266, %p267
      %s270 = sadd.s32 %s269, 1
      %p273 = scmp.eq.s32.totalorder %s27, 3
      %p274 = scmp.ne.s32.totalorder %s269, %s271
      %p275 = scmp.eq.s32.totalorder %s27, 0
      %p276 = por %p274, %p275
      %p277 = scmp.ne.s32.totalorder %s269, %s271
      %p278 = scmp.eq.s32.totalorder %s32, 3
      %p279 = por %p277, %p278
      %p280 = scmp.ne.s32.totalorder %s271, %s272
      %p281 = scmp.eq.s32.totalorder %s32, 0
      %p282 = por %p280, %p281
      %p283 = scmp.ne.s32.totalorder %s271, %s272
      %p284 = scmp.eq.s32.totalorder %s33, 3
      %p285 = por %p283, %p284
      %p287 = scmp.ne.s32.totalorder %s272, %s286
      %p288 = scmp.eq.s32.totalorder %s33, 0
      %p289 = por %p287, %p288
      %s290 = ssub.s32 %s34, %s46
      %s291 = ssub.s32 %s35, %s42
      %s292 = sor.u32 %s290, %s291
      %p293 = scmp.eq.s32.totalorder %s292, 0
      %s295 = sadd.s32 %s294, 1
      %s296 = scalar_select %p293, %s294, %s295
      %p299 = pneg %p293
      %p300 = scmp.eq.s32.totalorder %s27, 3
      %p301 = por %p299, %p300
      %p302 = scmp.ne.s32.totalorder %s294, %s297
      %p303 = scmp.eq.s32.totalorder %s27, 0
      %p304 = por %p302, %p303
      %p305 = scmp.ne.s32.totalorder %s294, %s297
      %p306 = scmp.eq.s32.totalorder %s32, 3
      %p307 = por %p305, %p306
      %p308 = scmp.ne.s32.totalorder %s297, %s298
      %p309 = scmp.eq.s32.totalorder %s32, 0
      %p310 = por %p308, %p309
      %p311 = scmp.ne.s32.totalorder %s297, %s298
      %p312 = scmp.eq.s32.totalorder %s33, 3
      %p313 = por %p311, %p312
      %p315 = scmp.ne.s32.totalorder %s298, %s314
      %p316 = scmp.eq.s32.totalorder %s33, 0
      %p317 = por %p315, %p316
      %p318 = scmp.le.s32.totalorder 1, %s27
      %p319 = scmp.lt.s32.totalorder %s27, 5
      %p320 = pnand %p318, %p319
      %p321 = pneg %p320
      // Predicated region
      $region9: #{tpu_custom_call.1} parent=5 // pred_check
        _
      $region10: #{tpu_custom_call.1} parent=5 // pred_check_branch
        %323 = sbr.rel (%p320) target = $region12
      $region11: #{tpu_custom_call.1} parent=5 // pred_region
        %s324 = ssub.s32 %s27, 1
        // Predicated region
        $region13: #{tpu_custom_call.1} parent=11 // pred_check
          %p325 = pneg %p114
        $region14: #{tpu_custom_call.1} parent=11 // pred_check_branch
          %327 = sbr.rel (%p325) target = $region16
        $region15: #{tpu_custom_call.1} parent=11 // pred_region
          _
        $region16: #{tpu_custom_call.1} parent=11 // pred_fallthru
          _
        // Predicated region
        $region17: #{tpu_custom_call.1} parent=11 // pred_check
          %p328 = pneg %p135
        $region18: #{tpu_custom_call.1} parent=11 // pred_check_branch
          %330 = sbr.rel (%p328) target = $region20
        $region19: #{tpu_custom_call.1} parent=11 // pred_region
          _
        $region20: #{tpu_custom_call.1} parent=11 // pred_fallthru
          _
        // Predicated region
        $region21: #{tpu_custom_call.1} parent=11 // pred_check
          %p331 = pneg %p156
        $region22: #{tpu_custom_call.1} parent=11 // pred_check_branch
          %333 = sbr.rel (%p331) target = $region24
        $region23: #{tpu_custom_call.1} parent=11 // pred_region
          _
        $region24: #{tpu_custom_call.1} parent=11 // pred_fallthru
          _
        // Predicated region
        $region25: #{tpu_custom_call.1} parent=11 // pred_check
          %p334 = pneg %p177
        $region26: #{tpu_custom_call.1} parent=11 // pred_check_branch
          %336 = sbr.rel (%p334) target = $region28
        $region27: #{tpu_custom_call.1} parent=11 // pred_region
          _
        $region28: #{tpu_custom_call.1} parent=11 // pred_fallthru
          _
        // Predicated region
        $region29: #{tpu_custom_call.1} parent=11 // pred_check
          %p337 = pneg %p198
        $region30: #{tpu_custom_call.1} parent=11 // pred_check_branch
          %339 = sbr.rel (%p337) target = $region32
        $region31: #{tpu_custom_call.1} parent=11 // pred_region
          _
        $region32: #{tpu_custom_call.1} parent=11 // pred_fallthru
          _
        // Predicated region
        $region33: #{tpu_custom_call.1} parent=11 // pred_check
          %p340 = pneg %p219
        $region34: #{tpu_custom_call.1} parent=11 // pred_check_branch
          %342 = sbr.rel (%p340) target = $region36
        $region35: #{tpu_custom_call.1} parent=11 // pred_region
          _
        $region36: #{tpu_custom_call.1} parent=11 // pred_fallthru
          _
        // Predicated region
        $region37: #{tpu_custom_call.1} parent=11 // pred_check
          %p343 = pneg %p240
        $region38: #{tpu_custom_call.1} parent=11 // pred_check_branch
          %345 = sbr.rel (%p343) target = $region40
        $region39: #{tpu_custom_call.1} parent=11 // pred_region
          _
        $region40: #{tpu_custom_call.1} parent=11 // pred_fallthru
          _
        // Predicated region
        $region41: #{tpu_custom_call.1} parent=11 // pred_check
          %p346 = pneg %p261
        $region42: #{tpu_custom_call.1} parent=11 // pred_check_branch
          %348 = sbr.rel (%p346) target = $region44
        $region43: #{tpu_custom_call.1} parent=11 // pred_region
          _
        $region44: #{tpu_custom_call.1} parent=11 // pred_fallthru
          _
        // Predicated region
        $region45: #{tpu_custom_call.1} parent=11 // pred_check
          %p349 = pneg %p282
        $region46: #{tpu_custom_call.1} parent=11 // pred_check_branch
          %351 = sbr.rel (%p349) target = $region48
        $region47: #{tpu_custom_call.1} parent=11 // pred_region
          _
        $region48: #{tpu_custom_call.1} parent=11 // pred_fallthru
          _
      $region12: #{tpu_custom_call.1} parent=5 // pred_fallthru
        _
      %p352 = scmp.lt.s32.totalorder %s27, 4
      // Predicated region
      $region49: #{tpu_custom_call.1} parent=5 // pred_check
        %p353 = pneg %p352
      $region50: #{tpu_custom_call.1} parent=5 // pred_check_branch
        %355 = sbr.rel (%p353) target = $region52
      $region51: #{tpu_custom_call.1} parent=5 // pred_region
        // Predicated region
        $region53: #{tpu_custom_call.1} parent=51 // pred_check
          %p356 = pneg %p61
        $region54: #{tpu_custom_call.1} parent=51 // pred_check_branch
          %358 = sbr.rel (%p356) target = $region56
        $region55: #{tpu_custom_call.1} parent=51 // pred_region
          %s359 = sand.u32 %s51, 1
          %s360 = scalar_lea.sflag [#allocation4], %s359
          %s361 = sand.u32 %s51, 1
          %s362 = smul.addr %s361, 16
          %s363 = scalar_lea.vmem [#allocation3], %s362
          %365 = vsyncadd %s360, 0
          %s366 = smul.addr %s34, 4
          %s367 = sadd.s32 %s35, %s366
          %s368 = smul.addr %s367, 8
          %s369 = scalar_lea.hbm %s0, %s368
          %s370 = sshll.u32 %s369, 4
          %s371 = int_to_ptr.hbm [resolvable:$true] %s370
          %s372 = sshll.u32 %s363, 4
          %s373 = int_to_ptr.vmem [resolvable:$true] %s372
          %378 = dma.hbm_to_vmem [thread:$0]  %s371, 256, %s373, %s360, 256, 128, 8
        $region56: #{tpu_custom_call.1} parent=51 // pred_fallthru
          _
        // Predicated region
        $region57: #{tpu_custom_call.1} parent=51 // pred_check
          %p379 = pneg %p87
        $region58: #{tpu_custom_call.1} parent=51 // pred_check_branch
          %381 = sbr.rel (%p379) target = $region60
        $region59: #{tpu_custom_call.1} parent=51 // pred_region
          %s382 = sand.u32 %s77, 1
          %s383 = scalar_lea.sflag [#allocation7], %s382
          %s384 = sand.u32 %s77, 1
          %s385 = smul.addr %s384, 16
          %s386 = scalar_lea.vmem [#allocation6], %s385
          %388 = vsyncadd %s383, 0
          %s389 = smul.addr %s34, 4
          %s390 = smul.addr %s389, 4
          %s391 = scalar_lea.hbm %s1, %s390
          %s392 = sshll.u32 %s391, 4
          %s393 = int_to_ptr.hbm [resolvable:$true] %s392
          %s394 = sshll.u32 %s386, 4
          %s395 = int_to_ptr.vmem [resolvable:$true] %s394
          %400 = dma.hbm_to_vmem [thread:$0]  %s393, 256, %s395, %s383, 128, 128, 8
        $region60: #{tpu_custom_call.1} parent=51 // pred_fallthru
          _
      $region52: #{tpu_custom_call.1} parent=5 // pred_fallthru
        _
      %p401 = scmp.le.s32.totalorder 1, %s27
      %p402 = scmp.lt.s32.totalorder %s27, 5
      %p403 = pnand %p401, %p402
      %p404 = pneg %p403
      // Predicated region
      $region61: #{tpu_custom_call.1} parent=5 // pred_check
        _
      $region62: #{tpu_custom_call.1} parent=5 // pred_check_branch
        %406 = sbr.rel (%p403) target = $region64
      $region63: #{tpu_custom_call.1} parent=5 // pred_region
        %s407 = ssub.s32 %s27, 1
        %s408 = sand.u32 %s54, 1
        %s409 = scalar_lea.sflag [#allocation4], %s408
        %s410 = sand.u32 %s54, 1
        %s411 = smul.addr %s410, 16
        %s412 = scalar_lea.vmem [#allocation3], %s411
        // Predicated region
        $region65: #{tpu_custom_call.1} parent=63 // pred_check
          %p413 = pneg %p67
        $region66: #{tpu_custom_call.1} parent=63 // pred_check_branch
          %415 = sbr.rel (%p413) target = $region68
        $region67: #{tpu_custom_call.1} parent=63 // pred_region
          %417 = dma.done %s409, 256
        $region68: #{tpu_custom_call.1} parent=63 // pred_fallthru
          _
        %s418 = sand.u32 %s80, 1
        %s419 = scalar_lea.sflag [#allocation7], %s418
        %s420 = sand.u32 %s80, 1
        %s421 = smul.addr %s420, 16
        %s422 = scalar_lea.vmem [#allocation6], %s421
        // Predicated region
        $region69: #{tpu_custom_call.1} parent=63 // pred_check
          %p423 = pneg %p93
        $region70: #{tpu_custom_call.1} parent=63 // pred_check_branch
          %425 = sbr.rel (%p423) target = $region72
        $region71: #{tpu_custom_call.1} parent=63 // pred_region
          %427 = dma.done %s419, 256
        $region72: #{tpu_custom_call.1} parent=63 // pred_fallthru
          _
        %s428 = sand.u32 %s54, 1
        %s429 = scalar_lea.sflag [#allocation4], %s428
        %s430 = sand.u32 %s54, 1
        %s431 = smul.addr %s430, 16
        %s432 = scalar_lea.vmem [#allocation3], %s431
        %p433 = pneg %p67
        %p434 = pneg %p64
        %s435 = sand.u32 %s80, 1
        %s436 = scalar_lea.sflag [#allocation7], %s435
        %s437 = sand.u32 %s80, 1
        %s438 = smul.addr %s437, 16
        %s439 = scalar_lea.vmem [#allocation6], %s438
        %p440 = pneg %p93
        %p441 = pneg %p90
        %p442 = pneg %p114
        %p443 = pneg %p111
        %p444 = pneg %p135
        %p445 = pneg %p132
        %p446 = pneg %p156
        %p447 = pneg %p153
        %p448 = pneg %p177
        %p449 = pneg %p174
        %p450 = pneg %p198
        %p451 = pneg %p195
        %p452 = pneg %p219
        %p453 = pneg %p216
        %p454 = pneg %p240
        %p455 = pneg %p237
        %p456 = pneg %p261
        %p457 = pneg %p258
        %p458 = pneg %p282
        %p459 = pneg %p279
        %p460 = pneg %p310
        %p461 = pneg %p307
        %s462 = sand.u32 %s297, 1
        %s463 = scalar_lea.sflag [#allocation5], %s462
        %s464 = sand.u32 %s297, 1
        %s465 = smul.addr %s464, 16
        %s466 = scalar_lea.vmem [#allocation8], %s465
        %v468 = vld [vmem:[%s412] sm:$0xff]
        %v469 = vld [vmem:[%s412 + $0x8] sm:$0xff]
        %v470 = vpack.c.bf16 %v469, %v468
        %v471 = vld [vmem:[%s422] sm:$0xff]
        %v472 = vld [vmem:[%s422 + $0x8] sm:$0xff]
        %v473 = vld [vmem:[%s2] sm:$0x1]
        %v474 = vld [vmem:[%s3] sm:$0x3]
        %476 = vset.pattern.permute.xlu0 0
        %477 = vperm.xlu0 %476, %v474
        %v478 = vpop.permute.xlu0 %477
        %vm480 = vcmask 130048
        %v482 = vsel %vm480, %v473, 0
        %484 = vmatpush.bf16.msra.mxu0 0
        %485 = vmatpush.bf16.msra.mxu0 0
        %486 = vmatpush.bf16.msra.mxu0 0
        %487 = vmatpush.bf16.msra.mxu0 0
        %488 = vmatpush.bf16.msra.mxu0 0
        %489 = vmatpush.bf16.msra.mxu0 0
        %490 = vmatpush.bf16.msra.mxu0 0
        %491 = vmatpush.bf16.msra.mxu0 %v470
        %492 = vmatmul.bf16.gmra.mxu0 %v482
        %v493 = vpop.f32.mrf.mxu0
        %v494 = vadd.f32 %v478, %v493
        %v495 = vpop.f32.mrf.mxu0
        %496 = vdwg.mxu0
        %v497 = vld [vmem:[%s4] sm:$0x1]
        %v498 = vld [vmem:[%s5] sm:$0x3]
        %v501 = vunpack.c.l.b16 %v471
        %v502 = vunpack.c.h.b16 %v471
        %v503 = vunpack.c.l.b16 %v472
        %v504 = vunpack.c.h.b16 %v472
        %v505 = vpack.c.b16 %v503, %v501
        %v506 = vpack.c.b16 %v504, %v502
        %v510 = vsel %vm480, %v497, 0
        %512 = vmatpush.bf16.msra.mxu0 0
        %513 = vmatpush.bf16.msra.mxu0 0
        %514 = vmatpush.bf16.msra.mxu0 0
        %515 = vmatpush.bf16.msra.mxu0 0
        %516 = vmatpush.bf16.msra.mxu0 0
        %517 = vmatpush.bf16.msra.mxu0 0
        %518 = vmatpush.bf16.msra.mxu0 0
        %519 = vmatpush.bf16.msra.mxu0 %v505
        %520 = vmatmul.bf16.gmra.mxu0 %v510
        %v521 = vpop.f32.mrf.mxu0
        %v522 = vadd.f32 0.0, %v521
        %v523 = vpop.f32.mrf.mxu0
        %524 = vdwg.mxu0
        %525 = vmatpush.bf16.msra.mxu0 0
        %526 = vmatpush.bf16.msra.mxu0 0
        %527 = vmatpush.bf16.msra.mxu0 0
        %528 = vmatpush.bf16.msra.mxu0 0
        %529 = vmatpush.bf16.msra.mxu0 0
        %530 = vmatpush.bf16.msra.mxu0 0
        %531 = vmatpush.bf16.msra.mxu0 0
        %532 = vmatpush.bf16.msra.mxu0 %v506
        %533 = vmatmul.bf16.gmra.mxu0 %v510
        %v534 = vpop.f32.mrf.mxu0
        %v535 = vadd.f32 0.0, %v534
        %v536 = vpop.f32.mrf.mxu0
        %537 = vdwg.mxu0
        %539 = vrot.lane.b32.xlu0 %v522, 64
        %v540 = vpop.permute.xlu0 %539
        %v542 = vmax.f32 %v522, %v540
        %544 = vrot.lane.b32.xlu0 %v535, 64
        %v545 = vpop.permute.xlu0 %544
        %v547 = vmax.f32 %v535, %v545
        %v548 = vmax.f32 %v542, %v547
        %550 = vset.pattern.permute.xlu0 0
        %551 = vperm.xlu0 %550, %v498
        %v552 = vpop.permute.xlu0 %551
        %v554 = vadd.f32 %v548, %v552
        %v555 = vld [vmem:[%s6] sm:$0xf]
        %v556 = vld [vmem:[%s7] sm:$0xff]
        %v558 = vsel %vm480, %v555, 0
        %560 = vmatpush.bf16.msra.mxu0 0
        %561 = vmatpush.bf16.msra.mxu0 0
        %562 = vmatpush.bf16.msra.mxu0 0
        %563 = vmatpush.bf16.msra.mxu0 0
        %564 = vmatpush.bf16.msra.mxu0 0
        %565 = vmatpush.bf16.msra.mxu0 0
        %566 = vmatpush.bf16.msra.mxu0 0
        %567 = vmatpush.bf16.msra.mxu0 %v505
        %568 = vmatmul.bf16.gmra.mxu0 %v558
        %v569 = vpop.f32.mrf.mxu0
        %v570 = vadd.f32 0.0, %v569
        %v571 = vpop.f32.mrf.mxu0
        %572 = vdwg.mxu0
        %573 = vmatpush.bf16.msra.mxu0 0
        %574 = vmatpush.bf16.msra.mxu0 0
        %575 = vmatpush.bf16.msra.mxu0 0
        %576 = vmatpush.bf16.msra.mxu0 0
        %577 = vmatpush.bf16.msra.mxu0 0
        %578 = vmatpush.bf16.msra.mxu0 0
        %579 = vmatpush.bf16.msra.mxu0 0
        %580 = vmatpush.bf16.msra.mxu0 %v506
        %581 = vmatmul.bf16.gmra.mxu0 %v558
        %v582 = vpop.f32.mrf.mxu0
        %v583 = vadd.f32 0.0, %v582
        %v584 = vpop.f32.mrf.mxu0
        %585 = vdwg.mxu0
        %587 = vrot.lane.b32.xlu0 %v570, 64
        %v588 = vpop.permute.xlu0 %587
        %v590 = vmax.f32 %v570, %v588
        %592 = vrot.lane.b32.xlu0 %v583, 64
        %v593 = vpop.permute.xlu0 %592
        %v595 = vmax.f32 %v583, %v593
        %v596 = vmax.f32 %v590, %v595
        %598 = vset.pattern.permute.xlu0 0
        %599 = vperm.xlu0 %598, %v556
        %v600 = vpop.permute.xlu0 %599
        %v602 = vadd.f32 %v596, %v600
        %603 = vxpose.xlu0.b32.start [1/16] %v554, 128
        %604 = vxpose.xlu0.b32.cont [2/16] 0.0, 128
        %605 = vxpose.xlu0.b32.cont [3/16] 0.0, 128
        %606 = vxpose.xlu0.b32.cont [4/16] 0.0, 128
        %607 = vxpose.xlu0.b32.cont [5/16] 0.0, 128
        %608 = vxpose.xlu0.b32.cont [6/16] 0.0, 128
        %609 = vxpose.xlu0.b32.cont [7/16] 0.0, 128
        %610 = vxpose.xlu0.b32.cont [8/16] 0.0, 128
        %611 = vxpose.xlu0.b32.cont [9/16] 0.0, 128
        %612 = vxpose.xlu0.b32.cont [10/16] 0.0, 128
        %613 = vxpose.xlu0.b32.cont [11/16] 0.0, 128
        %614 = vxpose.xlu0.b32.cont [12/16] 0.0, 128
        %615 = vxpose.xlu0.b32.cont [13/16] 0.0, 128
        %616 = vxpose.xlu0.b32.cont [14/16] 0.0, 128
        %617 = vxpose.xlu0.b32.cont [15/16] 0.0, 128
        %618 = vxpose.xlu0.b32.end [16/16] 0.0, 128
        %v619 = vpop.trf.xlu0
        %v620 = vpop.trf.xlu0
        %v621 = vpop.trf.xlu0
        %v622 = vpop.trf.xlu0
        %v623 = vpop.trf.xlu0
        %v624 = vpop.trf.xlu0
        %v625 = vpop.trf.xlu0
        %v626 = vpop.trf.xlu0
        %v627 = vpop.trf.xlu0
        %v628 = vpop.trf.xlu0
        %v629 = vpop.trf.xlu0
        %v630 = vpop.trf.xlu0
        %v631 = vpop.trf.xlu0
        %v632 = vpop.trf.xlu0
        %v633 = vpop.trf.xlu0
        %v634 = vpop.trf.xlu0
        %vm635 = vcmask 15360
        %v637 = vsel %vm635, %v619, 0
        %v640 = vsel %vm635, %v620, 0
        %v643 = vsel %vm635, %v621, 0
        %v646 = vsel %vm635, %v622, 0
        %v649 = vsel %vm635, %v623, 0
        %v652 = vsel %vm635, %v624, 0
        %v655 = vsel %vm635, %v625, 0
        %v658 = vsel %vm635, %v626, 0
        %vm660 = vcmask 1041408
        %v662 = vsel %vm660, %v494, 0
        %664 = vmatpush.msra.mxu0 0.0
        %665 = vmatpush.msra.mxu0 0.0
        %666 = vmatpush.msra.mxu0 0.0
        %667 = vmatpush.msra.mxu0 0.0
        %668 = vmatpush.msra.mxu0 0.0
        %669 = vmatpush.msra.mxu0 0.0
        %670 = vmatpush.msra.mxu0 0.0
        %671 = vmatpush.msra.mxu0 0.0
        %672 = vmatpush.msra.mxu0 0.0
        %673 = vmatpush.msra.mxu0 0.0
        %674 = vmatpush.msra.mxu0 0.0
        %675 = vmatpush.msra.mxu0 0.0
        %676 = vmatpush.msra.mxu0 0.0
        %677 = vmatpush.msra.mxu0 0.0
        %678 = vmatpush.msra.mxu0 0.0
        %679 = vmatpush.msra.mxu0 %v662
        %680 = vmatmul.f32.gmra.mxu0 %v637
        %v681 = vpop.f32.mrf.mxu0
        %v682 = vadd.f32 0.0, %v681
        %683 = vmatmul.f32.gmra.mxu0 %v640
        %v684 = vpop.f32.mrf.mxu0
        %v685 = vadd.f32 0.0, %v684
        %686 = vmatmul.f32.gmra.mxu0 %v643
        %v687 = vpop.f32.mrf.mxu0
        %v688 = vadd.f32 0.0, %v687
        %689 = vmatmul.f32.gmra.mxu0 %v646
        %v690 = vpop.f32.mrf.mxu0
        %v691 = vadd.f32 0.0, %v690
        %692 = vmatmul.f32.gmra.mxu0 %v649
        %v693 = vpop.f32.mrf.mxu0
        %v694 = vadd.f32 0.0, %v693
        %695 = vmatmul.f32.gmra.mxu0 %v652
        %v696 = vpop.f32.mrf.mxu0
        %v697 = vadd.f32 0.0, %v696
        %698 = vmatmul.f32.gmra.mxu0 %v655
        %v699 = vpop.f32.mrf.mxu0
        %v700 = vadd.f32 0.0, %v699
        %701 = vmatmul.f32.gmra.mxu0 %v658
        %v702 = vpop.f32.mrf.mxu0
        %v703 = vadd.f32 0.0, %v702
        %704 = vdwg.mxu0
        %v705 = vmax.f32 %v682, %v694
        %v706 = vmax.f32 %v685, %v697
        %v707 = vmax.f32 %v688, %v700
        %v708 = vmax.f32 %v691, %v703
        %v709 = vmax.f32 %v705, %v706
        %v710 = vmax.f32 %v707, %v708
        %v711 = vmax.f32 %v709, %v710
        %v712 = vrot.slane %v711, 4
        %v713 = vmax.f32 %v711, %v712
        %v714 = vrot.slane %v713, 2
        %v715 = vmax.f32 %v713, %v714
        %v716 = vrot.slane %v715, 1
        %v717 = vmax.f32 %v715, %v716
        %v718 = vsub.f32 %v682, %v717
        %v719 = vsub.f32 %v685, %v717
        %v720 = vsub.f32 %v688, %v717
        %v721 = vsub.f32 %v691, %v717
        %v722 = vsub.f32 %v694, %v717
        %v723 = vsub.f32 %v697, %v717
        %v724 = vsub.f32 %v700, %v717
        %v725 = vsub.f32 %v703, %v717
        %v726 = vmul.f32 %v718, 1.442695
        %v727 = vpow.pop %v726
        %v728 = vmul.f32 %v719, 1.442695
        %v729 = vpow.pop %v728
        %v730 = vmul.f32 %v720, 1.442695
        %v731 = vpow.pop %v730
        %v732 = vmul.f32 %v721, 1.442695
        %v733 = vpow.pop %v732
        %v734 = vmul.f32 %v722, 1.442695
        %v735 = vpow.pop %v734
        %v736 = vmul.f32 %v723, 1.442695
        %v737 = vpow.pop %v736
        %v738 = vmul.f32 %v724, 1.442695
        %v739 = vpow.pop %v738
        %v740 = vmul.f32 %v725, 1.442695
        %v741 = vpow.pop %v740
        %v742 = vadd.f32 %v727, %v729
        %v743 = vadd.f32 %v742, %v731
        %v744 = vadd.f32 %v743, %v733
        %v745 = vadd.f32 %v744, %v735
        %v746 = vadd.f32 %v745, %v737
        %v747 = vadd.f32 %v746, %v739
        %v748 = vadd.f32 %v747, %v741
        %v749 = vrot.slane %v748, 4
        %v750 = vadd.f32 %v748, %v749
        %v751 = vrot.slane %v750, 2
        %v752 = vadd.f32 %v750, %v751
        %v753 = vrot.slane %v752, 1
        %v754 = vadd.f32 %v752, %v753
        %v755 = vrcp.pop %v754
        %v756 = vmul.f32 %v727, %v755
        %v757 = vmul.f32 %v729, %v755
        %v758 = vmul.f32 %v731, %v755
        %v759 = vmul.f32 %v733, %v755
        %v760 = vmul.f32 %v735, %v755
        %v761 = vmul.f32 %v737, %v755
        %v762 = vmul.f32 %v739, %v755
        %v763 = vmul.f32 %v741, %v755
        %v764 = vpack.c.bf16 %v602, %v602
        %v765 = vpack.c.bf16 %v757, %v756
        %v766 = vpack.c.bf16 %v759, %v758
        %v767 = vpack.c.bf16 %v761, %v760
        %v768 = vpack.c.bf16 %v763, %v762
        %vm769 = vcmask 523264
        %v771 = vsel %vm769, %v764, 0
        %773 = vmatpush.bf16.msra.mxu0 0
        %774 = vmatpush.bf16.msra.mxu0 0
        %775 = vmatpush.bf16.msra.mxu0 0
        %776 = vmatpush.bf16.msra.mxu0 0
        %777 = vmatpush.bf16.msra.mxu0 %v768
        %778 = vmatpush.bf16.msra.mxu0 %v767
        %779 = vmatpush.bf16.msra.mxu0 %v766
        %780 = vmatpush.bf16.msra.mxu0 %v765
        %781 = vmatmul.bf16.gmra.mxu0 %v771
        %v782 = vpop.f32.mrf.mxu0
        %v783 = vadd.f32 0.0, %v782
        %v784 = vpop.f32.mrf.mxu0
        %785 = vdwg.mxu0
        %v786 = vld [vmem:[%s8] sm:$0xf]
        %v787 = vld [vmem:[%s8 + $0x4] sm:$0xf]
        %v788 = vpack.c.bf16 %v783, %v783
        %v789 = vld [vmem:[%s9] sm:$0xff]
        %v790 = vld [vmem:[%s9 + $0x8] sm:$0xff]
        %792 = vset.pattern.permute.xlu0 0
        %793 = vperm.xlu0 %792, %v789
        %v794 = vpop.permute.xlu0 %793
        %797 = vset.pattern.permute.xlu0 0
        %798 = vperm.xlu0 %797, %v790
        %v799 = vpop.permute.xlu0 %798
        %v803 = vunpack.c.l.b16 %v786
        %v804 = vunpack.c.l.b16 %v787
        %v805 = vpack.c.b16 %v804, %v803
        %vm806 = vcmask 64512
        %v808 = vsel %vm806, %v805, 0
        %vm810 = vcmask 1043456
        %v812 = vsel %vm810, %v788, 0
        %814 = vmatpush.bf16.msra.mxu0 0
        %815 = vmatpush.bf16.msra.mxu0 0
        %816 = vmatpush.bf16.msra.mxu0 0
        %817 = vmatpush.bf16.msra.mxu0 0
        %818 = vmatpush.bf16.msra.mxu0 0
        %819 = vmatpush.bf16.msra.mxu0 0
        %820 = vmatpush.bf16.msra.mxu0 0
        %821 = vmatpush.bf16.msra.mxu0 %v812
        %822 = vmatmul.bf16.gmra.mxu0 %v808
        %v823 = vpop.f32.mrf.mxu0
        %v824 = vadd.f32 %v794, %v823
        %v825 = vpop.f32.mrf.mxu0
        %v826 = vadd.f32 %v799, %v825
        %827 = vdwg.mxu0
        %s828 = sld [smem:[#allocation2]]
        %v829 = vstv %s828
        %v830 = vmul.f32 %v829, %v824
        %v831 = vmul.f32 %v829, %v826
        %v832 = vadd.f32 %v468, %v830
        %v833 = vadd.f32 %v469, %v831
        %834 = vst [vmem:[%s466] sm:$0xff] %v832
        %835 = vst [vmem:[%s466 + $0x8] sm:$0xff] %v833
        %s836 = sand.u32 %s297, 1
        %s837 = scalar_lea.sflag [#allocation5], %s836
        %s838 = sand.u32 %s297, 1
        %s839 = smul.addr %s838, 16
        %s840 = scalar_lea.vmem [#allocation8], %s839
        // Predicated region
        $region73: #{tpu_custom_call.1} parent=63 // pred_check
          %p841 = pneg %p307
        $region74: #{tpu_custom_call.1} parent=63 // pred_check_branch
          %843 = sbr.rel (%p841) target = $region76
        $region75: #{tpu_custom_call.1} parent=63 // pred_region
          %845 = vsyncadd %s837, 0
          %s846 = smul.addr %s36, 4
          %s847 = sadd.s32 %s37, %s846
          %s848 = smul.addr %s847, 8
          %s849 = scalar_lea.hbm %s11, %s848
          %s850 = sshll.u32 %s840, 4
          %s851 = int_to_ptr.vmem [resolvable:$true] %s850
          %s852 = sshll.u32 %s849, 4
          %s853 = int_to_ptr.hbm [resolvable:$true] %s852
          %858 = dma.vmem_to_hbm [thread:$0]  %s851, 256, %s853, %s837, 128, 256, 8
        $region76: #{tpu_custom_call.1} parent=63 // pred_fallthru
          _
      $region64: #{tpu_custom_call.1} parent=5 // pred_fallthru
        _
      %p859 = scmp.le.s32.totalorder 2, %s27
      // Predicated region
      $region77: #{tpu_custom_call.1} parent=5 // pred_check
        %p860 = pneg %p859
      $region78: #{tpu_custom_call.1} parent=5 // pred_check_branch
        %862 = sbr.rel (%p860) target = $region80
      $region79: #{tpu_custom_call.1} parent=5 // pred_region
        %s863 = ssub.s32 %s27, 2
        // Predicated region
        $region81: #{tpu_custom_call.1} parent=79 // pred_check
          %p864 = pneg %p313
        $region82: #{tpu_custom_call.1} parent=79 // pred_check_branch
          %866 = sbr.rel (%p864) target = $region84
        $region83: #{tpu_custom_call.1} parent=79 // pred_region
          %s867 = sand.u32 %s298, 1
          %s868 = scalar_lea.sflag [#allocation5], %s867
          %s869 = sand.u32 %s298, 1
          %s870 = smul.addr %s869, 16
          %s871 = scalar_lea.vmem [#allocation8], %s870
          %873 = dma.done %s868, 256
        $region84: #{tpu_custom_call.1} parent=79 // pred_fallthru
          _
      $region80: #{tpu_custom_call.1} parent=5 // pred_fallthru
        _
    $region6: #{tpu_custom_call.1} parent=1 // loop_footer
      %s31 = sadd.s32 1, %s27
    $region7: #{tpu_custom_call.1} parent=1 // loop_footer_branch
      %26 = sbr.rel target = $region3
    $region8: #{tpu_custom_call.1} parent=1 // loop_exit
      _
    %874 = vsyncpa [#allocation4], 1
    %s875 = scalar_lea.sflag [#allocation4], 1
    %876 = vsyncpa %s875, 1
    %877 = vsyncpa [#allocation7], 1
    %s878 = scalar_lea.sflag [#allocation7], 1
    %879 = vsyncpa %s878, 1
    %880 = vsyncpa [#allocation5], 1
    %s881 = scalar_lea.sflag [#allocation5], 1
    %882 = vsyncpa %s881, 1

</llo_original>
